<compile_context>
chip_gen: v5e
topology: v5e:2x2
jax: 0.10.0
libtpu: 0.0.40
codegen_flags: <defaults>
</compile_context>

<pallas_src>
import math

import jax
import jax.numpy as jnp
from jax.experimental import pallas as pl
from jax.experimental.pallas import tpu as pltpu


def _round_up(n, m):
    return ((n + m - 1) // m) * m


# ----------------------------- fused kernel ---------------------------------

def _fused_kernel(xi_ref, xjt_ref, w1_ref, b1_ref, w2_ref, b2_ref,
                  wh_ref, bh_ref, out_ref):
    xi = xi_ref[...]                                             # (tm, F) f32

    # per-row MLP (BN affines folded into the Linears host-side; the two
    # scoring heads are fused into one (16, 2) matmul + one sigmoid).
    h1 = jnp.dot(xi, w1_ref[...], preferred_element_type=jnp.float32) + b1_ref[...]
    h1 = jnp.maximum(h1, 0.0)
    h2 = jnp.dot(h1, w2_ref[...], preferred_element_type=jnp.float32) + b2_ref[...]
    h2 = jnp.maximum(h2, 0.0)
    heads = jax.nn.sigmoid(
        jnp.dot(h2, wh_ref[...], preferred_element_type=jnp.float32) + bh_ref[...])
    high = heads[:, 0:1]                                         # (tm, 1)
    low = heads[:, 1:2]                                          # (tm, 1)

    # per-row statistics over the feature axis (2 lane reductions)
    row_avg = jnp.mean(xi, axis=1, keepdims=True)                # (tm, 1)
    row_min = jnp.min(xi, axis=1, keepdims=True)                 # (tm, 1)

    weight = jax.nn.sigmoid(12.0 * (row_avg - 0.35))
    score = weight * high + (1.0 - weight) * low

    # NOTE: the original "input_max <= 0.4" branch computes 0.5 - (0.5-s)*2,
    # which is identical to the else branch 0.5 + (s-0.5)*2 -> dropped.
    score = jnp.where(row_min >= 0.5,
                      jnp.clip(0.5 + (score - 0.5) * 4.0, 0.0, 1.0),
                      jnp.clip(0.5 + (score - 0.5) * 2.0, 0.0, 1.0))
    # perfect_mask = (x > 0.8).all(dim=1)  ==  min(x, dim=1) > 0.8
    score = jnp.where(row_min > 0.8, 0.95, score)
    boost = jnp.clip(score * 1.2, 0.0, 1.0)

    # per-column mask from the transposed tile: feature axis on sublanes, so
    # the mean is a sublane reduction yielding a (1, tn) row directly.
    col_avg = jnp.mean(xjt_ref[...], axis=0, keepdims=True)      # (1, tn)
    col_mask = col_avg > 0.7

    # broadcast select reproducing torch.where((B,), (B,1), (B,1)) -> (B, B);
    # both sources already live in [0, 1] so the final clamp is a no-op.
    out_ref[...] = jnp.where(col_mask, boost, score)


# ------------------------------- parameters ---------------------------------

def init_params(key, input_dim: int = 5):
    """Deterministic init mirroring the PyTorch __init__ (shapes & intent)."""
    k1, k2, k3, k4 = jax.random.split(key, 4)
    f32 = jnp.float32

    # kaiming_normal_ (fan_in mode, gain=sqrt(2)): std = sqrt(2 / fan_in)
    w1 = jax.random.normal(k1, (32, input_dim), f32) * math.sqrt(2.0 / input_dim)
    b1 = jnp.full((32,), 0.2, f32)
    w2 = jax.random.normal(k2, (16, 32), f32) * math.sqrt(2.0 / 32.0)
    b2 = jnp.full((16,), 0.2, f32)

    wh = 0.3 + 0.1 * jax.random.normal(k3, (1, 16), f32)
    bh = jnp.full((1,), 1.0, f32)
    wl = -0.3 + 0.1 * jax.random.normal(k4, (1, 16), f32)
    bl = jnp.full((1,), -1.0, f32)

    # BatchNorm1d eval-mode affine, expressed as y = x * scale + shift
    eps = 1e-5
    scale1 = jnp.full((32,), 1.0 / math.sqrt(1.0 + eps), f32)
    shift1 = jnp.zeros((32,), f32)
    scale2 = jnp.full((16,), 1.0 / math.sqrt(1.0 + eps), f32)
    shift2 = jnp.zeros((16,), f32)

    return dict(w1=w1, b1=b1, scale1=scale1, shift1=shift1,
                w2=w2, b2=b2, scale2=scale2, shift2=shift2,
                wh=wh, bh=bh, wl=wl, bl=bl)


def _fold_params(params):
    """Fold BN affines into the Linears and fuse the two heads (host-side).

    Valid only for positive BN scales (relu(s*z) == s*relu(z) requires s>0).
    """
    s1, t1 = params["scale1"], params["shift1"]
    s2, t2 = params["scale2"], params["shift2"]

    w1t = params["w1"].T * s1[None, :]                                 # (F, 32)
    b1 = (params["b1"] * s1)[None, :]                                  # (1, 32)

    w2t = params["w2"].T * s2[None, :]                                 # (32, 16)
    b2 = ((params["b2"] + t1 @ params["w2"].T) * s2)[None, :]          # (1, 16)

    wht = jnp.concatenate([params["wh"].T, params["wl"].T], axis=1)    # (16, 2)
    bhl = jnp.concatenate([params["bh"], params["bl"]])                # (2,)
    bht = (bhl + t2 @ wht)[None, :]                                    # (1, 2)
    return w1t, b1, w2t, b2, wht, bht


# --------------------------------- wrapper -----------------------------------

def event_scoring_forward(x, params, *, tm=1024, tn=2048):
    x = x.astype(jnp.float32)
    B, F = x.shape
    xt = x.T                                   # (F, B): layout plumbing only
    w1t, b1, w2t, b2, wht, bht = _fold_params(params)

    # tile sizes: row tile multiple of 8, column tile multiple of 128, each
    # clamped for small B (a dim equal to the full array extent is always OK).
    tm_eff = min(_round_up(tm, 8), _round_up(B, 8))
    if tm_eff >= B:
        tm_eff = B
    tn_eff = min(_round_up(tn, 128), _round_up(B, 128))
    if tn_eff >= B:
        tn_eff = B

    # v7x megacore: if the whole output is one tile but B is large enough,
    # halve the row tile so >= 2 parallel blocks exist to shard across TCs.
    if pl.cdiv(B, tm_eff) == 1 and pl.cdiv(B, tn_eff) == 1 and B >= 16:
        tm_eff = min(tm_eff, _round_up(pl.cdiv(B, 2), 8))

    grid = (pl.cdiv(B, tm_eff), pl.cdiv(B, tn_eff))
    n_row, n_col = grid

    mlp_flops = 2 * (F * 32 + 32 * 16 + 16 * 2)
    cost = pl.CostEstimate(
        flops=B * B + n_col * B * mlp_flops,
        transcendentals=3 * B * n_col,
        bytes_accessed=4 * (B * B + (n_row + n_col) * B * F
                            + F * 32 + 32 + 32 * 16 + 16 + 16 * 2 + 2))

    out = pl.pallas_call(
        _fused_kernel,
        grid=grid,
        in_specs=[
            pl.BlockSpec((tm_eff, F), lambda i, j: (i, 0)),     # x rows
            pl.BlockSpec((F, tn_eff), lambda i, j: (0, j)),     # x^T cols
            pl.BlockSpec(w1t.shape, lambda i, j: (0, 0)),
            pl.BlockSpec(b1.shape, lambda i, j: (0, 0)),
            pl.BlockSpec(w2t.shape, lambda i, j: (0, 0)),
            pl.BlockSpec(b2.shape, lambda i, j: (0, 0)),
            pl.BlockSpec(wht.shape, lambda i, j: (0, 0)),
            pl.BlockSpec(bht.shape, lambda i, j: (0, 0)),
        ],
        out_specs=pl.BlockSpec((tm_eff, tn_eff), lambda i, j: (i, j)),
        out_shape=jax.ShapeDtypeStruct((B, B), jnp.float32),
        compiler_params=pltpu.CompilerParams(
            dimension_semantics=("parallel", "parallel"),
            vmem_limit_bytes=32 * 1024 * 1024),
        cost_estimate=cost,
    )(x, xt, w1t, b1, w2t, b2, wht, bht)
    return out


# ------------------------- pure-JAX reference check --------------------------

def _reference(x, params):
    x = x.astype(jnp.float32)
    h1 = jnp.maximum(x @ params["w1"].T + params["b1"], 0.0)
    h1 = h1 * params["scale1"] + params["shift1"]
    h2 = jnp.maximum(h1 @ params["w2"].T + params["b2"], 0.0)
    h2 = h2 * params["scale2"] + params["shift2"]
    high = jax.nn.sigmoid(h2 @ params["wh"].T + params["bh"])
    low = jax.nn.sigmoid(h2 @ params["wl"].T + params["bl"])
    avg = jnp.mean(x, axis=1, keepdims=True)
    mn = jnp.min(x, axis=1, keepdims=True)
    mx = jnp.max(x, axis=1, keepdims=True)
    w = jax.nn.sigmoid(12.0 * (avg - 0.35))
    s = w * high + (1.0 - w) * low
    s = jnp.where(mn >= 0.5, jnp.clip(0.5 + (s - 0.5) * 4.0, 0.0, 1.0),
                  jnp.where(mx <= 0.4, jnp.clip(0.5 - (0.5 - s) * 2.0, 0.0, 1.0),
                            jnp.clip(0.5 + (s - 0.5) * 2.0, 0.0, 1.0)))
    s = jnp.where(jnp.all(x > 0.8, axis=1, keepdims=True), 0.95, s)
    mask_row = (avg[:, 0] > 0.7)[None, :]
    s_bb = jnp.where(mask_row, jnp.clip(s * 1.2, 0.0, 1.0), s)
    return jnp.clip(s_bb, 0.0, 1.0)


if __name__ == "__main__":
    key = jax.random.PRNGKey(0)
    kx1, kx2, kx3, kp = jax.random.split(key, 4)

    INPUT_DIM = 5
    params = init_params(kp, INPUT_DIM)

    # case 1: tiny batch, single tile on both grid axes (defaults clamp down)
    B1 = 8
    x1 = jax.random.uniform(kx1, (B1, INPUT_DIM), dtype=jnp.float32)
    out1 = event_scoring_forward(x1, params)
    jax.block_until_ready(out1)
    assert out1.shape == (B1, B1), out1.shape
    assert bool(jnp.all((out1 >= 0.0) & (out1 <= 1.0)))
    assert bool(jnp.allclose(out1, _reference(x1, params), atol=1e-5, rtol=1e-5))

    # case 2: non-tile-aligned batch with defaults — exercises the megacore
    # row-split guard and a partial edge row block.
    B2 = 20
    x2 = jax.random.uniform(kx2, (B2, INPUT_DIM), dtype=jnp.float32)
    out2 = event_scoring_forward(x2, params)
    jax.block_until_ready(out2)
    assert out2.shape == (B2, B2), out2.shape
    assert bool(jnp.all((out2 >= 0.0) & (out2 <= 1.0)))
    assert bool(jnp.allclose(out2, _reference(x2, params), atol=1e-5, rtol=1e-5))

    # case 3: explicit small tiles — multiple row AND column tiles with
    # partial (masked) edge blocks on both axes.
    B3 = 160
    x3 = jax.random.uniform(kx3, (B3, INPUT_DIM), dtype=jnp.float32)
    out3 = event_scoring_forward(x3, params, tm=64, tn=128)
    jax.block_until_ready(out3)
    assert out3.shape == (B3, B3), out3.shape
    assert bool(jnp.all((out3 >= 0.0) & (out3 <= 1.0)))
    assert bool(jnp.allclose(out3, _reference(x3, params), atol=1e-5, rtol=1e-5))

    print("KERNEL_OK")
</pallas_src>

<mosaic_0001>
module attributes {stable_mosaic.version = 11 : i64} {
  func.func @_fused_kernel(%arg0: i32, %arg1: i32, %arg2: memref<8x5xf32, #tpu.memory_space<vmem>>, %arg3: memref<5x8xf32, #tpu.memory_space<vmem>>, %arg4: memref<5x32xf32, #tpu.memory_space<vmem>>, %arg5: memref<1x32xf32, #tpu.memory_space<vmem>>, %arg6: memref<32x16xf32, #tpu.memory_space<vmem>>, %arg7: memref<1x16xf32, #tpu.memory_space<vmem>>, %arg8: memref<16x2xf32, #tpu.memory_space<vmem>>, %arg9: memref<1x2xf32, #tpu.memory_space<vmem>>, %arg10: memref<8x8xf32, #tpu.memory_space<vmem>>) attributes {dimension_semantics = [#tpu.dimension_semantics<parallel>, #tpu.dimension_semantics<parallel>], iteration_bounds = array<i64: 1, 1>, scalar_prefetch = 0 : i64, scratch_operands = 0 : i64, tpu.core_type = #tpu.core_type<tc>, window_params = [{transform_indices = @transform_0, window_bounds = array<i64: 8, 5>}, {transform_indices = @transform_1, window_bounds = array<i64: 5, 8>}, {pipeline_mode = #tpu.pipeline_mode<synchronous>, transform_indices = @transform_2, window_bounds = array<i64: 5, 32>}, {pipeline_mode = #tpu.pipeline_mode<synchronous>, transform_indices = @transform_3, window_bounds = array<i64: 1, 32>}, {pipeline_mode = #tpu.pipeline_mode<synchronous>, transform_indices = @transform_4, window_bounds = array<i64: 32, 16>}, {pipeline_mode = #tpu.pipeline_mode<synchronous>, transform_indices = @transform_5, window_bounds = array<i64: 1, 16>}, {pipeline_mode = #tpu.pipeline_mode<synchronous>, transform_indices = @transform_6, window_bounds = array<i64: 16, 2>}, {pipeline_mode = #tpu.pipeline_mode<synchronous>, transform_indices = @transform_7, window_bounds = array<i64: 1, 2>}, {transform_indices = @transform_8, window_bounds = array<i64: 8, 8>}]} {
    %c0 = arith.constant 0 : index
    %c0_0 = arith.constant 0 : index
    %0 = vector.load %arg2[%c0, %c0_0] : memref<8x5xf32, #tpu.memory_space<vmem>>, vector<8x5xf32>
    %c0_1 = arith.constant 0 : index
    %c0_2 = arith.constant 0 : index
    %1 = vector.load %arg4[%c0_1, %c0_2] : memref<5x32xf32, #tpu.memory_space<vmem>>, vector<5x32xf32>
    %cst = arith.constant dense<0.000000e+00> : vector<8x32xf32>
    %2 = tpu.matmul %0, %1, %cst {dimension_numbers = #tpu.dot_dimension_numbers<[1], [0], [0], [1], [0, 0, 1, 1], [], []>} : vector<8x5xf32>, vector<5x32xf32>, vector<8x32xf32> -> vector<8x32xf32>
    %c0_3 = arith.constant 0 : index
    %c0_4 = arith.constant 0 : index
    %3 = vector.load %arg5[%c0_3, %c0_4] : memref<1x32xf32, #tpu.memory_space<vmem>>, vector<1x32xf32>
    %4 = vector.broadcast %3 : vector<1x32xf32> to vector<8x32xf32>
    %5 = arith.addf %2, %4 : vector<8x32xf32>
    %cst_5 = arith.constant 0.000000e+00 : f32
    %6 = vector.broadcast %cst_5 : f32 to vector<8x32xf32>
    %7 = arith.maximumf %5, %6 : vector<8x32xf32>
    %c0_6 = arith.constant 0 : index
    %c0_7 = arith.constant 0 : index
    %8 = vector.load %arg6[%c0_6, %c0_7] : memref<32x16xf32, #tpu.memory_space<vmem>>, vector<32x16xf32>
    %cst_8 = arith.constant dense<0.000000e+00> : vector<8x16xf32>
    %9 = tpu.matmul %7, %8, %cst_8 {dimension_numbers = #tpu.dot_dimension_numbers<[1], [0], [0], [1], [0, 0, 1, 1], [], []>} : vector<8x32xf32>, vector<32x16xf32>, vector<8x16xf32> -> vector<8x16xf32>
    %c0_9 = arith.constant 0 : index
    %c0_10 = arith.constant 0 : index
    %10 = vector.load %arg7[%c0_9, %c0_10] : memref<1x16xf32, #tpu.memory_space<vmem>>, vector<1x16xf32>
    %11 = vector.broadcast %10 : vector<1x16xf32> to vector<8x16xf32>
    %12 = arith.addf %9, %11 : vector<8x16xf32>
    %cst_11 = arith.constant 0.000000e+00 : f32
    %13 = vector.broadcast %cst_11 : f32 to vector<8x16xf32>
    %14 = arith.maximumf %12, %13 : vector<8x16xf32>
    %c0_12 = arith.constant 0 : index
    %c0_13 = arith.constant 0 : index
    %15 = vector.load %arg8[%c0_12, %c0_13] : memref<16x2xf32, #tpu.memory_space<vmem>>, vector<16x2xf32>
    %cst_14 = arith.constant dense<0.000000e+00> : vector<8x2xf32>
    %16 = tpu.matmul %14, %15, %cst_14 {dimension_numbers = #tpu.dot_dimension_numbers<[1], [0], [0], [1], [0, 0, 1, 1], [], []>} : vector<8x16xf32>, vector<16x2xf32>, vector<8x2xf32> -> vector<8x2xf32>
    %c0_15 = arith.constant 0 : index
    %c0_16 = arith.constant 0 : index
    %17 = vector.load %arg9[%c0_15, %c0_16] : memref<1x2xf32, #tpu.memory_space<vmem>>, vector<1x2xf32>
    %18 = vector.broadcast %17 : vector<1x2xf32> to vector<8x2xf32>
    %19 = arith.addf %16, %18 : vector<8x2xf32>
    %20 = arith.negf %19 : vector<8x2xf32>
    %21 = math.exp %20 : vector<8x2xf32>
    %cst_17 = arith.constant 1.000000e+00 : f32
    %22 = vector.broadcast %cst_17 : f32 to vector<8x2xf32>
    %23 = arith.addf %22, %21 : vector<8x2xf32>
    %24 = arith.divf %22, %23 : vector<8x2xf32>
    %25 = vector.extract_strided_slice %24 {offsets = [0, 0], sizes = [8, 1], strides = [1, 1]} : vector<8x2xf32> to vector<8x1xf32>
    %26 = vector.extract_strided_slice %24 {offsets = [0, 1], sizes = [8, 1], strides = [1, 1]} : vector<8x2xf32> to vector<8x1xf32>
    %cst_18 = arith.constant dense<0.000000e+00> : vector<8xf32>
    %27 = vector.multi_reduction <add>, %0, %cst_18 [1] : vector<8x5xf32> to vector<8xf32>
    %28 = vector.shape_cast %27 : vector<8xf32> to vector<8x1xf32>
    %cst_19 = arith.constant 5.000000e+00 : f32
    %29 = vector.broadcast %cst_19 : f32 to vector<8x1xf32>
    %30 = arith.divf %28, %29 : vector<8x1xf32>
    %cst_20 = arith.constant dense<0x7F800000> : vector<8xf32>
    %31 = vector.multi_reduction <minimumf>, %0, %cst_20 [1] : vector<8x5xf32> to vector<8xf32>
    %32 = vector.shape_cast %31 : vector<8xf32> to vector<8x1xf32>
    %cst_21 = arith.constant 3.500000e-01 : f32
    %33 = vector.broadcast %cst_21 : f32 to vector<8x1xf32>
    %34 = arith.subf %30, %33 : vector<8x1xf32>
    %cst_22 = arith.constant 1.200000e+01 : f32
    %35 = vector.broadcast %cst_22 : f32 to vector<8x1xf32>
    %36 = arith.mulf %35, %34 : vector<8x1xf32>
    %37 = arith.negf %36 : vector<8x1xf32>
    %38 = math.exp %37 : vector<8x1xf32>
    %cst_23 = arith.constant 1.000000e+00 : f32
    %39 = vector.broadcast %cst_23 : f32 to vector<8x1xf32>
    %40 = arith.addf %39, %38 : vector<8x1xf32>
    %41 = arith.divf %39, %40 : vector<8x1xf32>
    %42 = arith.mulf %41, %25 : vector<8x1xf32>
    %cst_24 = arith.constant 1.000000e+00 : f32
    %43 = vector.broadcast %cst_24 : f32 to vector<8x1xf32>
    %44 = arith.subf %43, %41 : vector<8x1xf32>
    %45 = arith.mulf %44, %26 : vector<8x1xf32>
    %46 = arith.addf %42, %45 : vector<8x1xf32>
    %cst_25 = arith.constant 5.000000e-01 : f32
    %47 = vector.broadcast %cst_25 : f32 to vector<8x1xf32>
    %48 = arith.cmpf oge, %32, %47 : vector<8x1xf32>
    %cst_26 = arith.constant 5.000000e-01 : f32
    %49 = vector.broadcast %cst_26 : f32 to vector<8x1xf32>
    %50 = arith.subf %46, %49 : vector<8x1xf32>
    %cst_27 = arith.constant 4.000000e+00 : f32
    %51 = vector.broadcast %cst_27 : f32 to vector<8x1xf32>
    %52 = arith.mulf %50, %51 : vector<8x1xf32>
    %cst_28 = arith.constant 5.000000e-01 : f32
    %53 = vector.broadcast %cst_28 : f32 to vector<8x1xf32>
    %54 = arith.addf %53, %52 : vector<8x1xf32>
    %cst_29 = arith.constant 0.000000e+00 : f32
    %cst_30 = arith.constant 1.000000e+00 : f32
    %55 = vector.broadcast %cst_29 : f32 to vector<8x1xf32>
    %56 = arith.maximumf %55, %54 : vector<8x1xf32>
    %57 = vector.broadcast %cst_30 : f32 to vector<8x1xf32>
    %58 = arith.minimumf %57, %56 : vector<8x1xf32>
    %cst_31 = arith.constant 5.000000e-01 : f32
    %59 = vector.broadcast %cst_31 : f32 to vector<8x1xf32>
    %60 = arith.subf %46, %59 : vector<8x1xf32>
    %cst_32 = arith.constant 2.000000e+00 : f32
    %61 = vector.broadcast %cst_32 : f32 to vector<8x1xf32>
    %62 = arith.mulf %60, %61 : vector<8x1xf32>
    %cst_33 = arith.constant 5.000000e-01 : f32
    %63 = vector.broadcast %cst_33 : f32 to vector<8x1xf32>
    %64 = arith.addf %63, %62 : vector<8x1xf32>
    %cst_34 = arith.constant 0.000000e+00 : f32
    %cst_35 = arith.constant 1.000000e+00 : f32
    %65 = vector.broadcast %cst_34 : f32 to vector<8x1xf32>
    %66 = arith.maximumf %65, %64 : vector<8x1xf32>
    %67 = vector.broadcast %cst_35 : f32 to vector<8x1xf32>
    %68 = arith.minimumf %67, %66 : vector<8x1xf32>
    %69 = arith.select %48, %58, %68 : vector<8x1xi1>, vector<8x1xf32>
    %cst_36 = arith.constant 8.000000e-01 : f32
    %70 = vector.broadcast %cst_36 : f32 to vector<8x1xf32>
    %71 = arith.cmpf ogt, %32, %70 : vector<8x1xf32>
    %cst_37 = arith.constant 0.949999988 : f32
    %72 = vector.broadcast %cst_37 : f32 to vector<8x1xf32>
    %73 = arith.select %71, %72, %69 : vector<8x1xi1>, vector<8x1xf32>
    %cst_38 = arith.constant 1.200000e+00 : f32
    %74 = vector.broadcast %cst_38 : f32 to vector<8x1xf32>
    %75 = arith.mulf %73, %74 : vector<8x1xf32>
    %cst_39 = arith.constant 0.000000e+00 : f32
    %cst_40 = arith.constant 1.000000e+00 : f32
    %76 = vector.broadcast %cst_39 : f32 to vector<8x1xf32>
    %77 = arith.maximumf %76, %75 : vector<8x1xf32>
    %78 = vector.broadcast %cst_40 : f32 to vector<8x1xf32>
    %79 = arith.minimumf %78, %77 : vector<8x1xf32>
    %c0_41 = arith.constant 0 : index
    %c0_42 = arith.constant 0 : index
    %80 = vector.load %arg3[%c0_41, %c0_42] : memref<5x8xf32, #tpu.memory_space<vmem>>, vector<5x8xf32>
    %cst_43 = arith.constant dense<0.000000e+00> : vector<8xf32>
    %81 = vector.multi_reduction <add>, %80, %cst_43 [0] : vector<5x8xf32> to vector<8xf32>
    %82 = vector.shape_cast %81 : vector<8xf32> to vector<1x8xf32>
    %cst_44 = arith.constant 5.000000e+00 : f32
    %83 = vector.broadcast %cst_44 : f32 to vector<1x8xf32>
    %84 = arith.divf %82, %83 : vector<1x8xf32>
    %cst_45 = arith.constant 0.699999988 : f32
    %85 = vector.broadcast %cst_45 : f32 to vector<1x8xf32>
    %86 = arith.cmpf ogt, %84, %85 : vector<1x8xf32>
    %87 = vector.shape_cast %86 : vector<1x8xi1> to vector<1x8xi1>
    %88 = vector.broadcast %87 : vector<1x8xi1> to vector<8x8xi1>
    %89 = vector.shape_cast %79 : vector<8x1xf32> to vector<8x1xf32>
    %90 = vector.broadcast %89 : vector<8x1xf32> to vector<8x8xf32>
    %91 = vector.shape_cast %73 : vector<8x1xf32> to vector<8x1xf32>
    %92 = vector.broadcast %91 : vector<8x1xf32> to vector<8x8xf32>
    %93 = arith.select %88, %90, %92 : vector<8x8xi1>, vector<8x8xf32>
    %c0_46 = arith.constant 0 : index
    %c0_47 = arith.constant 0 : index
    %94 = vector.load %arg10[%c0_46, %c0_47] : memref<8x8xf32, #tpu.memory_space<vmem>>, vector<8x8xf32>
    tpu.vector_store %arg10[%c0_46, %c0_47], %93 {strides = array<i32>} : memref<8x8xf32, #tpu.memory_space<vmem>>, vector<8x8xf32>,
    return
  }
  func.func @transform_0(%arg0: i32, %arg1: i32) -> (i32, i32) {
    %c0_i32 = arith.constant 0 : i32
    %c0_i32_0 = arith.constant 0 : i32
    return %arg0, %c0_i32 : i32, i32
  }
  func.func @transform_1(%arg0: i32, %arg1: i32) -> (i32, i32) {
    %c0_i32 = arith.constant 0 : i32
    %c0_i32_0 = arith.constant 0 : i32
    return %c0_i32, %arg1 : i32, i32
  }
  func.func @transform_2(%arg0: i32, %arg1: i32) -> (i32, i32) {
    %c0_i32 = arith.constant 0 : i32
    %c0_i32_0 = arith.constant 0 : i32
    %c0_i32_1 = arith.constant 0 : i32
    return %c0_i32, %c0_i32_0 : i32, i32
  }
  func.func @transform_3(%arg0: i32, %arg1: i32) -> (i32, i32) {
    %c0_i32 = arith.constant 0 : i32
    %c0_i32_0 = arith.constant 0 : i32
    %c0_i32_1 = arith.constant 0 : i32
    return %c0_i32, %c0_i32_0 : i32, i32
  }
  func.func @transform_4(%arg0: i32, %arg1: i32) -> (i32, i32) {
    %c0_i32 = arith.constant 0 : i32
    %c0_i32_0 = arith.constant 0 : i32
    %c0_i32_1 = arith.constant 0 : i32
    return %c0_i32, %c0_i32_0 : i32, i32
  }
  func.func @transform_5(%arg0: i32, %arg1: i32) -> (i32, i32) {
    %c0_i32 = arith.constant 0 : i32
    %c0_i32_0 = arith.constant 0 : i32
    %c0_i32_1 = arith.constant 0 : i32
    return %c0_i32, %c0_i32_0 : i32, i32
  }
  func.func @transform_6(%arg0: i32, %arg1: i32) -> (i32, i32) {
    %c0_i32 = arith.constant 0 : i32
    %c0_i32_0 = arith.constant 0 : i32
    %c0_i32_1 = arith.constant 0 : i32
    return %c0_i32, %c0_i32_0 : i32, i32
  }
  func.func @transform_7(%arg0: i32, %arg1: i32) -> (i32, i32) {
    %c0_i32 = arith.constant 0 : i32
    %c0_i32_0 = arith.constant 0 : i32
    %c0_i32_1 = arith.constant 0 : i32
    return %c0_i32, %c0_i32_0 : i32, i32
  }
  func.func @transform_8(%arg0: i32, %arg1: i32) -> (i32, i32) {
    %c0_i32 = arith.constant 0 : i32
    return %arg0, %arg1 : i32, i32
  }
}

</mosaic_0001>

<llo_original>
// kernel: tpu_custom_call.1
$region0: #{tpu_custom_call.1}
  #allocation0 [shape = 'u32[]', space=smem, size = 0x4, offset = 0x4, fixed_abs, tag = 'smem constant byte address 0x4 - core index']
  #allocation1 [shape = 'u32[72,128]{1,0:T(1,128)}', space=vmem, size = 0x9000, scoped, tag = 'internal scratch']
  %s0 = inlined_call_operand.vmem [shape: f32[8,5], index: 0, kind: input, shape index: {}]
  %s1 = inlined_call_operand.vmem [shape: f32[5,8], index: 1, kind: input, shape index: {}]
  %s2 = inlined_call_operand.vmem [shape: f32[5,32], index: 2, kind: input, shape index: {}]
  %s3 = inlined_call_operand.vmem [shape: f32[1,32], index: 3, kind: input, shape index: {}]
  %s4 = inlined_call_operand.vmem [shape: f32[32,16], index: 4, kind: input, shape index: {}]
  %s5 = inlined_call_operand.vmem [shape: f32[1,16], index: 5, kind: input, shape index: {}]
  %s6 = inlined_call_operand.vmem [shape: f32[16,2], index: 6, kind: input, shape index: {}]
  %s7 = inlined_call_operand.vmem [shape: f32[1,2], index: 7, kind: input, shape index: {}]
  %s8 = inlined_call_operand.hbm [shape: f32[8,8], index: 8, kind: output, shape index: {}]
  %s9 = sld [smem:[#allocation0]]
  $region42: #{tpu_custom_call.1} parent=0
    _
  %s11 = ssub.s32 1, %s9
  %s12 = scalar_select 0, %s11, %s9
  $region1: #{tpu_custom_call.1} parent=0
    #allocation2 [shape = 'u8[4096]{0}', space=vmem, size = 0x1000, scoped, tag = 'output window, operand 0, single buffered']
    #allocation3 [shape = 's32[1]{0}', space=sflag, size = 0x4, scoped, tag = 'scoped memory for tpu_custom_call.1']
    %13 = vsyncpa [#allocation3], 0
    // Predicated region
    $region2: #{tpu_custom_call.1} parent=1 // pred_check
      _
    $region3: #{tpu_custom_call.1} parent=1 // pred_check_branch
      %15 = sbr.rel (0) target = $region5
    $region4: #{tpu_custom_call.1} parent=1 // pred_region
      _
    $region5: #{tpu_custom_call.1} parent=1 // pred_fallthru
      _
    // Predicated region
    $region6: #{tpu_custom_call.1} parent=1 // pred_check
      _
    $region7: #{tpu_custom_call.1} parent=1 // pred_check_branch
      %17 = sbr.rel (0) target = $region9
    $region8: #{tpu_custom_call.1} parent=1 // pred_region
      _
    $region9: #{tpu_custom_call.1} parent=1 // pred_fallthru
      _
    // Predicated region
    $region10: #{tpu_custom_call.1} parent=1 // pred_check
      _
    $region11: #{tpu_custom_call.1} parent=1 // pred_check_branch
      %19 = sbr.rel (0) target = $region13
    $region12: #{tpu_custom_call.1} parent=1 // pred_region
      _
    $region13: #{tpu_custom_call.1} parent=1 // pred_fallthru
      _
    // Predicated region
    $region14: #{tpu_custom_call.1} parent=1 // pred_check
      _
    $region15: #{tpu_custom_call.1} parent=1 // pred_check_branch
      %21 = sbr.rel (0) target = $region17
    $region16: #{tpu_custom_call.1} parent=1 // pred_region
      _
    $region17: #{tpu_custom_call.1} parent=1 // pred_fallthru
      _
    // Predicated region
    $region18: #{tpu_custom_call.1} parent=1 // pred_check
      _
    $region19: #{tpu_custom_call.1} parent=1 // pred_check_branch
      %23 = sbr.rel (0) target = $region21
    $region20: #{tpu_custom_call.1} parent=1 // pred_region
      _
    $region21: #{tpu_custom_call.1} parent=1 // pred_fallthru
      _
    // Predicated region
    $region22: #{tpu_custom_call.1} parent=1 // pred_check
      _
    $region23: #{tpu_custom_call.1} parent=1 // pred_check_branch
      %25 = sbr.rel (0) target = $region25
    $region24: #{tpu_custom_call.1} parent=1 // pred_region
      _
    $region25: #{tpu_custom_call.1} parent=1 // pred_fallthru
      _
    // Predicated region
    $region26: #{tpu_custom_call.1} parent=1 // pred_check
      _
    $region27: #{tpu_custom_call.1} parent=1 // pred_check_branch
      %27 = sbr.rel (0) target = $region29
    $region28: #{tpu_custom_call.1} parent=1 // pred_region
      _
    $region29: #{tpu_custom_call.1} parent=1 // pred_fallthru
      _
    // Predicated region
    $region30: #{tpu_custom_call.1} parent=1 // pred_check
      _
    $region31: #{tpu_custom_call.1} parent=1 // pred_check_branch
      %29 = sbr.rel (0) target = $region33
    $region32: #{tpu_custom_call.1} parent=1 // pred_region
      _
    $region33: #{tpu_custom_call.1} parent=1 // pred_fallthru
      _
    %v30 = vld [vmem:[%s0] sm:$0xff]
    %v31 = vld [vmem:[%s2] sm:$0x1f]
    %v32 = vld [vmem:[%s3] sm:$0x1]
    %v34 = vperm.slane %v32, 0
    %vm36 = vcmask 39936
    %v38 = vsel %vm36, %v30, 0
    %vm40 = vcmask 1044480
    %v42 = vsel %vm40, %v31, 0
    %44 = vmatpush.msra.mxu0 0.0
    %45 = vmatpush.msra.mxu0 0.0
    %46 = vmatpush.msra.mxu0 0.0
    %47 = vmatpush.msra.mxu0 0.0
    %48 = vmatpush.msra.mxu0 0.0
    %49 = vmatpush.msra.mxu0 0.0
    %50 = vmatpush.msra.mxu0 0.0
    %51 = vmatpush.msra.mxu0 0.0
    %52 = vmatpush.msra.mxu0 0.0
    %53 = vmatpush.msra.mxu0 0.0
    %54 = vmatpush.msra.mxu0 0.0
    %55 = vmatpush.msra.mxu0 0.0
    %56 = vmatpush.msra.mxu0 0.0
    %57 = vmatpush.msra.mxu0 0.0
    %58 = vmatpush.msra.mxu0 0.0
    %59 = vmatpush.msra.mxu0 %v42
    %60 = vmatmul.f32.gmra.mxu0 %v38
    %v61 = vpop.f32.mrf.mxu0
    %v62 = vadd.f32 %v34, %v61
    %63 = vdwg.mxu0
    %v64 = vmax.f32 %v62, 0.0
    %v65 = vld [vmem:[%s4] sm:$0xff]
    %v66 = vld [vmem:[%s4 + $0x8] sm:$0xff]
    %v67 = vld [vmem:[%s4 + $0x10] sm:$0xff]
    %v68 = vld [vmem:[%s4 + $0x18] sm:$0xff]
    %v69 = vld [vmem:[%s5] sm:$0x1]
    %v71 = vperm.slane %v69, 0
    %vm73 = vcmask 261120
    %v75 = vsel %vm73, %v64, 0
    %77 = vmatpush.msra.mxu0 0.0
    %78 = vmatpush.msra.mxu0 0.0
    %79 = vmatpush.msra.mxu0 0.0
    %80 = vmatpush.msra.mxu0 0.0
    %81 = vmatpush.msra.mxu0 0.0
    %82 = vmatpush.msra.mxu0 0.0
    %83 = vmatpush.msra.mxu0 0.0
    %84 = vmatpush.msra.mxu0 0.0
    %85 = vmatpush.msra.mxu0 0.0
    %86 = vmatpush.msra.mxu0 0.0
    %87 = vmatpush.msra.mxu0 0.0
    %88 = vmatpush.msra.mxu0 0.0
    %89 = vmatpush.msra.mxu0 %v68
    %90 = vmatpush.msra.mxu0 %v67
    %91 = vmatpush.msra.mxu0 %v66
    %92 = vmatpush.msra.mxu0 %v65
    %93 = vmatmul.f32.gmra.mxu0 %v75
    %v94 = vpop.f32.mrf.mxu0
    %v95 = vadd.f32 %v71, %v94
    %96 = vdwg.mxu0
    %v97 = vmax.f32 %v95, 0.0
    %v98 = vld [vmem:[%s6] sm:$0xff]
    %v99 = vld [vmem:[%s6 + $0x8] sm:$0xff]
    %v100 = vld [vmem:[%s7] sm:$0x1]
    %v102 = vperm.slane %v100, 0
    %vm104 = vcmask 130048
    %v106 = vsel %vm104, %v97, 0
    %108 = vmatpush.msra.mxu0 0.0
    %109 = vmatpush.msra.mxu0 0.0
    %110 = vmatpush.msra.mxu0 0.0
    %111 = vmatpush.msra.mxu0 0.0
    %112 = vmatpush.msra.mxu0 0.0
    %113 = vmatpush.msra.mxu0 0.0
    %114 = vmatpush.msra.mxu0 0.0
    %115 = vmatpush.msra.mxu0 0.0
    %116 = vmatpush.msra.mxu0 0.0
    %117 = vmatpush.msra.mxu0 0.0
    %118 = vmatpush.msra.mxu0 0.0
    %119 = vmatpush.msra.mxu0 0.0
    %120 = vmatpush.msra.mxu0 0.0
    %121 = vmatpush.msra.mxu0 0.0
    %122 = vmatpush.msra.mxu0 %v99
    %123 = vmatpush.msra.mxu0 %v98
    %124 = vmatmul.f32.gmra.mxu0 %v106
    %v125 = vpop.f32.mrf.mxu0
    %v126 = vadd.f32 %v102, %v125
    %127 = vdwg.mxu0
    %v128 = vxor.u32 %v126, 2147483648
    %v129 = vmul.f32 %v128, 1.442695
    %v130 = vpow.pop %v129
    %v131 = vadd.f32 %v130, 1.0
    %v132 = vrcp.pop %v131
    %v133 = vmul.f32 %v131, %v132
    %v134 = vsub.f32 1.0, %v133
    %v135 = vmul.f32 %v132, %v134
    %v136 = vadd.f32 %v132, %v135
    %vm137 = vweird.f32 %v131
    %vm138 = vweird.f32 %v132
    %vm139 = vmor %vm137, %vm138
    %v140 = vsel %vm139, %v132, %v136
    %v141 = vand.u32 2147483647, %v131
    %vm142 = vcmp.eq.f32.partialorder %v141, 8.507059e+37
    %v143 = vand.u32 %v131, 2147483648
    %v144 = vor.u32 1.1754944e-38, %v143
    %v145 = vsel %vm142, %v144, %v140
    %v146 = vmul.f32 1.0, %v145
    %v147 = vsel %vm36, %v30, 0.0
    %148 = vadd.xlane.f32.xlu0 %v147
    %v149 = vpop.xlane.xlu0 %148
    %v150 = vrcp.pop 5.0
    %v151 = vmul.f32 5.0, %v150
    %v152 = vsub.f32 1.0, %v151
    %v153 = vmul.f32 %v150, %v152
    %v154 = vadd.f32 %v150, %v153
    %vm155 = vweird.f32 %v150
    %v156 = vsel %vm155, %v150, %v154
    %v157 = vmul.f32 %v149, %v156
    %v158 = vsel %vm36, %v30, inf
    %159 = vmin.xlane.f32.xlu0 %v158
    %v160 = vpop.xlane.xlu0 %159
    %v161 = vsub.f32 %v157, 0.35
    %v162 = vmul.f32 %v161, 12.0
    %v163 = vxor.u32 %v162, 2147483648
    %v164 = vmul.f32 %v163, 1.442695
    %v165 = vpow.pop %v164
    %v166 = vadd.f32 %v165, 1.0
    %v167 = vrcp.pop %v166
    %v168 = vmul.f32 %v166, %v167
    %v169 = vsub.f32 1.0, %v168
    %v170 = vmul.f32 %v167, %v169
    %v171 = vadd.f32 %v167, %v170
    %vm172 = vweird.f32 %v166
    %vm173 = vweird.f32 %v167
    %vm174 = vmor %vm172, %vm173
    %v175 = vsel %vm174, %v167, %v171
    %v176 = vand.u32 2147483647, %v166
    %vm177 = vcmp.eq.f32.partialorder %v176, 8.507059e+37
    %v178 = vand.u32 %v166, 2147483648
    %v179 = vor.u32 1.1754944e-38, %v178
    %v180 = vsel %vm177, %v179, %v175
    %v181 = vmul.f32 1.0, %v180
    %v182 = vmul.f32 %v181, %v146
    %v183 = vsub.f32 1.0, %v181
    %v184 = vmul.f32 %v183, %v146
    %186 = vrot.lane.b32.xlu0 %v184, 127
    %v187 = vpop.permute.xlu0 %186
    %v189 = vadd.f32 %v182, %v187
    %vm190 = vcmp.ge.f32.partialorder %v160, 0.5
    %v191 = vsub.f32 %v189, 0.5
    %v192 = vmul.f32 %v191, 4.0
    %v193 = vadd.f32 %v192, 0.5
    %v194 = vmax.f32 %v193, 0.0
    %v195 = vmin.f32 %v194, 1.0
    %v196 = vmul.f32 %v191, 2.0
    %v197 = vadd.f32 %v196, 0.5
    %v198 = vmax.f32 %v197, 0.0
    %v199 = vmin.f32 %v198, 1.0
    %v200 = vsel %vm190, %v195, %v199
    %vm201 = vcmp.gt.f32.partialorder %v160, 0.8
    %v202 = vsel %vm201, 0.95, %v200
    %v203 = vmul.f32 %v202, 1.2
    %v204 = vmax.f32 %v203, 0.0
    %v205 = vmin.f32 %v204, 1.0
    %v206 = vld [vmem:[%s1] sm:$0x1f]
    %vm207 = vcmask 61440
    %v208 = vsel %vm207, %v206, 0.0
    %v209 = vrot.slane %v208, 4
    %v210 = vadd.f32 %v208, %v209
    %v211 = vrot.slane %v210, 2
    %v212 = vadd.f32 %v210, %v211
    %v213 = vrot.slane %v212, 1
    %v214 = vadd.f32 %v212, %v213
    %v215 = vmul.f32 %v214, %v156
    %vm216 = vcmp.gt.f32.partialorder %v215, 0.7
    %v217 = vsel %vm216, 1, 0
    %vm218 = vcmp.eq.s32.totalorder %v217, 1
    %220 = vset.pattern.permute.xlu0 0
    %221 = vperm.xlu0 %220, %v205
    %v222 = vpop.permute.xlu0 %221
    %225 = vset.pattern.permute.xlu0 0
    %226 = vperm.xlu0 %225, %v202
    %v227 = vpop.permute.xlu0 %226
    %v229 = vsel %vm218, %v222, %v227
    %vm230 = vcmask 64512
    %231 = vst.msk [vmem:[#allocation2] sm:$0xff] %vm230, %v229
    // Predicated region
    $region34: #{tpu_custom_call.1} parent=1 // pred_check
      _
    $region35: #{tpu_custom_call.1} parent=1 // pred_check_branch
      %233 = sbr.rel (0) target = $region37
    $region36: #{tpu_custom_call.1} parent=1 // pred_region
      %235 = vsyncadd [#allocation3], 0
      %s237 = sshll.u32 [#allocation2], 4
      %s238 = int_to_ptr.vmem [resolvable:$true] %s237
      %s239 = sshll.u32 %s8, 4
      %s240 = int_to_ptr.hbm [resolvable:$true] %s239
      %242 = dma.vmem_to_hbm [thread:$0]  %s238, 128, %s240, [#allocation3]
    $region37: #{tpu_custom_call.1} parent=1 // pred_fallthru
      _
    // Predicated region
    $region38: #{tpu_custom_call.1} parent=1 // pred_check
      _
    $region39: #{tpu_custom_call.1} parent=1 // pred_check_branch
      %244 = sbr.rel (0) target = $region41
    $region40: #{tpu_custom_call.1} parent=1 // pred_region
      %246 = dma.done [#allocation3], 128
    $region41: #{tpu_custom_call.1} parent=1 // pred_fallthru
      _
    %247 = vsyncpa [#allocation3], 1

</llo_original>
